<compile_context>
chip_gen: v7x
topology: tpu7x:2x2x1
jax: 0.10.0
libtpu: 0.0.40
codegen_flags: <defaults>
</compile_context>

<pallas_src>
import functools

import jax
import jax.numpy as jnp
from jax import lax
from jax.experimental import pallas as pl
from jax.experimental.pallas import tpu as pltpu


def _round_up(n, m):
    return ((n + m - 1) // m) * m


def _cdiv(a, b):
    return -(-a // b)


def _critic_kernel(x_ref,
                   w1_ref, b1_ref,
                   w2_ref, b2_ref,
                   w3_ref, b3_ref,
                   w4t_ref, b4_ref,
                   o_ref):
    """Whole 4-layer MLP for one batch tile; all operands resident in VMEM."""
    mxu_dtype = w1_ref.dtype                 # f32 or bf16 MXU operand dtype
    h = x_ref[...].astype(mxu_dtype)         # in-kernel cast (no wrapper copy)

    # Hidden layers: MXU dot (f32 accumulate), bias + ReLU in f32 on the VPU.
    for w_ref, b_ref in ((w1_ref, b1_ref), (w2_ref, b2_ref), (w3_ref, b3_ref)):
        h = jnp.dot(h, w_ref[...], preferred_element_type=jnp.float32)
        h = jnp.maximum(h + b_ref[...], 0.0).astype(mxu_dtype)

    # Final layer, batch-packed: contract the feature dim of h (axis 1)
    # against w4t's feature dim (axis 1) -> (1, batch_tile); batch on lanes.
    out = lax.dot_general(w4t_ref[...], h,
                          dimension_numbers=(((1,), (1,)), ((), ())),
                          preferred_element_type=jnp.float32)
    o_ref[...] = out + b4_ref[...]           # (1, batch_tile) lane-dense store


def prepare_critic_params(params, mxu_dtype=jnp.bfloat16):
    """One-time weight prep (pad/cast/transpose) hoisted out of the forward.

    Returns (w1p, b1p, w2p, b2, w3, b3, w4t, b4) ready for critic_forward.
    Padding with exact zeros keeps the math bit-identical (ReLU(0) = 0 and
    zero rows of w2 contribute nothing).
    """
    (w1, b1), (w2, b2), (w3, b3), (w4, b4) = params
    S, H1 = w1.shape
    H2 = w2.shape[1]
    H1P = _round_up(H1, 128)                  # 300 -> 384

    w1p = jnp.zeros((S, H1P), jnp.float32).at[:, :H1].set(w1).astype(mxu_dtype)
    b1p = jnp.zeros((1, H1P), jnp.float32).at[:, :H1].set(b1)
    w2p = jnp.zeros((H1P, H2), jnp.float32).at[:H1, :].set(w2).astype(mxu_dtype)
    w3c = w3.astype(mxu_dtype)
    w4t = jnp.transpose(w4).astype(mxu_dtype)          # (1, 128) row
    b4c = jnp.reshape(b4, (1, 1)).astype(jnp.float32)  # scalar bias
    return (w1p, b1p, w2p, b2.astype(jnp.float32), w3c,
            b3.astype(jnp.float32), w4t, b4c)


def _choose_batch_tile(B):
    if B <= 256:
        return B                              # single exact tile, no padding
    # >= 2 balanced grid steps (v7x megacore), <= ~1024 rows/tile, 128-aligned
    # so the packed (1, batch_tile) output block stays legal across the grid.
    num_tiles = max(2, 2 * _cdiv(B, 2048))
    return _round_up(_cdiv(B, num_tiles), 128)


@functools.partial(jax.jit, static_argnames=("batch_tile",))
def critic_forward(x, prepared, *, batch_tile=None):
    """x: (B, state_size) f32, prepared = prepare_critic_params(...) -> (B, 1)."""
    w1p, b1p, w2p, b2, w3c, b3, w4t, b4 = prepared
    B, S = x.shape

    if batch_tile is None:
        batch_tile = _choose_batch_tile(B)
    BP = _round_up(B, batch_tile)
    grid_steps = BP // batch_tile
    assert grid_steps == 1 or batch_tile % 128 == 0, (
        "multi-tile packed output requires a 128-aligned batch_tile")

    # Pad batch only when the tile does not divide B (padded rows discarded).
    xp = x if BP == B else jnp.zeros((BP, S), x.dtype).at[:B].set(x)

    def rep(a):  # replicated (constant index_map) weight/bias block
        return pl.BlockSpec(a.shape, lambda i: (0, 0))

    out_packed = pl.pallas_call(
        _critic_kernel,
        out_shape=jax.ShapeDtypeStruct((1, BP), jnp.float32),
        grid_spec=pltpu.PrefetchScalarGridSpec(
            num_scalar_prefetch=0,
            grid=(grid_steps,),
            in_specs=[
                pl.BlockSpec((batch_tile, S), lambda i: (i, 0)),
                rep(w1p), rep(b1p),
                rep(w2p), rep(b2),
                rep(w3c), rep(b3),
                rep(w4t), rep(b4),
            ],
            out_specs=pl.BlockSpec((1, batch_tile), lambda i: (0, i)),
        ),
        compiler_params=pltpu.CompilerParams(
            dimension_semantics=("parallel",)),
    )(xp, w1p, b1p, w2p, b2, w3c, b3, w4t, b4)

    # Drop batch padding; (1, B) -> (B, 1) is a pure reshape (no data motion).
    return jnp.reshape(out_packed[:, :B], (B, 1))


def init_critic_params(key, state_size):
    """Deterministic init mirroring nn.Linear's U(-1/sqrt(fan_in), +1/sqrt(fan_in)).

    Weights are stored transposed as (in, out); biases as (1, out).
    """
    dims = [(state_size, 300), (300, 128), (128, 128), (128, 1)]
    params = []
    for (fan_in, fan_out) in dims:
        key, kw, kb = jax.random.split(key, 3)
        bound = 1.0 / jnp.sqrt(jnp.float32(fan_in))
        w = jax.random.uniform(kw, (fan_in, fan_out), jnp.float32, -bound, bound)
        b = jax.random.uniform(kb, (1, fan_out), jnp.float32, -bound, bound)
        params.append((w, b))
    return params


def critic_reference(x, params):
    """Pure-JAX reference for correctness checking."""
    (w1, b1), (w2, b2), (w3, b3), (w4, b4) = params
    h = jnp.maximum(x @ w1 + b1, 0.0)
    h = jnp.maximum(h @ w2 + b2, 0.0)
    h = jnp.maximum(h @ w3 + b3, 0.0)
    return h @ w4 + b4


if __name__ == "__main__":
    key = jax.random.PRNGKey(0)
    state_size = 32
    action_size = 4   # unused by Critic.forward; kept for fidelity to __init__
    batch = 8

    kx, kp = jax.random.split(key)
    x = jax.random.normal(kx, (batch, state_size), jnp.float32)
    params = init_critic_params(kp, state_size)
    ref = critic_reference(x, params)

    # Exact f32-MXU path — tight tolerance.
    prep_f32 = prepare_critic_params(params, mxu_dtype=jnp.float32)
    out_f32 = critic_forward(x, prep_f32)
    jax.block_until_ready(out_f32)
    assert out_f32.shape == (batch, 1)
    assert jnp.allclose(out_f32, ref, atol=1e-4, rtol=1e-4)

    # Default bf16-MXU path (f32 accumulation) — looser tolerance
    # (x itself is quantized to bf16 inside the kernel).
    prep_bf16 = prepare_critic_params(params)
    out_bf16 = critic_forward(x, prep_bf16)
    jax.block_until_ready(out_bf16)
    assert out_bf16.shape == (batch, 1)
    assert jnp.allclose(out_bf16, ref, atol=1e-1, rtol=1e-1)

    # Multi-tile (grid > 1) packed-output path.
    xb = jax.random.normal(kx, (256, state_size), jnp.float32)
    refb = critic_reference(xb, params)
    out_b = critic_forward(xb, prep_f32, batch_tile=128)
    jax.block_until_ready(out_b)
    assert out_b.shape == (256, 1)
    assert jnp.allclose(out_b, refb, atol=1e-4, rtol=1e-4)

    print("KERNEL_OK")
</pallas_src>

<mosaic_0001>
module attributes {stable_mosaic.version = 11 : i64} {
  func.func @_critic_kernel(%arg0: i32, %arg1: memref<8x32xf32, #tpu.memory_space<vmem>>, %arg2: memref<32x384xf32, #tpu.memory_space<vmem>>, %arg3: memref<1x384xf32, #tpu.memory_space<vmem>>, %arg4: memref<384x128xf32, #tpu.memory_space<vmem>>, %arg5: memref<1x128xf32, #tpu.memory_space<vmem>>, %arg6: memref<128x128xf32, #tpu.memory_space<vmem>>, %arg7: memref<1x128xf32, #tpu.memory_space<vmem>>, %arg8: memref<1x128xf32, #tpu.memory_space<vmem>>, %arg9: memref<1x1xf32, #tpu.memory_space<vmem>>, %arg10: memref<1x8xf32, #tpu.memory_space<vmem>>) attributes {dimension_semantics = [#tpu.dimension_semantics<parallel>], iteration_bounds = array<i64: 1>, scalar_prefetch = 0 : i64, scratch_operands = 0 : i64, tpu.core_type = #tpu.core_type<tc>, window_params = [{transform_indices = @transform_0, window_bounds = array<i64: 8, 32>}, {pipeline_mode = #tpu.pipeline_mode<synchronous>, transform_indices = @transform_1, window_bounds = array<i64: 32, 384>}, {pipeline_mode = #tpu.pipeline_mode<synchronous>, transform_indices = @transform_2, window_bounds = array<i64: 1, 384>}, {pipeline_mode = #tpu.pipeline_mode<synchronous>, transform_indices = @transform_3, window_bounds = array<i64: 384, 128>}, {pipeline_mode = #tpu.pipeline_mode<synchronous>, transform_indices = @transform_4, window_bounds = array<i64: 1, 128>}, {pipeline_mode = #tpu.pipeline_mode<synchronous>, transform_indices = @transform_5, window_bounds = array<i64: 128, 128>}, {pipeline_mode = #tpu.pipeline_mode<synchronous>, transform_indices = @transform_6, window_bounds = array<i64: 1, 128>}, {pipeline_mode = #tpu.pipeline_mode<synchronous>, transform_indices = @transform_7, window_bounds = array<i64: 1, 128>}, {pipeline_mode = #tpu.pipeline_mode<synchronous>, transform_indices = @transform_8, window_bounds = array<i64: 1, 1>}, {transform_indices = @transform_9, window_bounds = array<i64: 1, 8>}]} {
    %c0 = arith.constant 0 : index
    %c0_0 = arith.constant 0 : index
    %0 = vector.load %arg1[%c0, %c0_0] : memref<8x32xf32, #tpu.memory_space<vmem>>, vector<8x32xf32>
    %c0_1 = arith.constant 0 : index
    %c0_2 = arith.constant 0 : index
    %1 = vector.load %arg2[%c0_1, %c0_2] : memref<32x384xf32, #tpu.memory_space<vmem>>, vector<32x384xf32>
    %cst = arith.constant dense<0.000000e+00> : vector<8x384xf32>
    %2 = tpu.matmul %0, %1, %cst {dimension_numbers = #tpu.dot_dimension_numbers<[1], [0], [0], [1], [0, 0, 1, 1], [], []>} : vector<8x32xf32>, vector<32x384xf32>, vector<8x384xf32> -> vector<8x384xf32>
    %c0_3 = arith.constant 0 : index
    %c0_4 = arith.constant 0 : index
    %3 = vector.load %arg3[%c0_3, %c0_4] : memref<1x384xf32, #tpu.memory_space<vmem>>, vector<1x384xf32>
    %4 = vector.broadcast %3 : vector<1x384xf32> to vector<8x384xf32>
    %5 = arith.addf %2, %4 : vector<8x384xf32>
    %cst_5 = arith.constant 0.000000e+00 : f32
    %6 = vector.broadcast %cst_5 : f32 to vector<8x384xf32>
    %7 = arith.maximumf %5, %6 : vector<8x384xf32>
    %c0_6 = arith.constant 0 : index
    %c0_7 = arith.constant 0 : index
    %8 = vector.load %arg4[%c0_6, %c0_7] : memref<384x128xf32, #tpu.memory_space<vmem>>, vector<384x128xf32>
    %cst_8 = arith.constant dense<0.000000e+00> : vector<8x128xf32>
    %9 = tpu.matmul %7, %8, %cst_8 {dimension_numbers = #tpu.dot_dimension_numbers<[1], [0], [0], [1], [0, 0, 1, 1], [], []>} : vector<8x384xf32>, vector<384x128xf32>, vector<8x128xf32> -> vector<8x128xf32>
    %c0_9 = arith.constant 0 : index
    %c0_10 = arith.constant 0 : index
    %10 = vector.load %arg5[%c0_9, %c0_10] : memref<1x128xf32, #tpu.memory_space<vmem>>, vector<1x128xf32>
    %11 = vector.broadcast %10 : vector<1x128xf32> to vector<8x128xf32>
    %12 = arith.addf %9, %11 : vector<8x128xf32>
    %cst_11 = arith.constant 0.000000e+00 : f32
    %13 = vector.broadcast %cst_11 : f32 to vector<8x128xf32>
    %14 = arith.maximumf %12, %13 : vector<8x128xf32>
    %c0_12 = arith.constant 0 : index
    %c0_13 = arith.constant 0 : index
    %15 = vector.load %arg6[%c0_12, %c0_13] : memref<128x128xf32, #tpu.memory_space<vmem>>, vector<128x128xf32>
    %cst_14 = arith.constant dense<0.000000e+00> : vector<8x128xf32>
    %16 = tpu.matmul %14, %15, %cst_14 {dimension_numbers = #tpu.dot_dimension_numbers<[1], [0], [0], [1], [0, 0, 1, 1], [], []>} : vector<8x128xf32>, vector<128x128xf32>, vector<8x128xf32> -> vector<8x128xf32>
    %c0_15 = arith.constant 0 : index
    %c0_16 = arith.constant 0 : index
    %17 = vector.load %arg7[%c0_15, %c0_16] : memref<1x128xf32, #tpu.memory_space<vmem>>, vector<1x128xf32>
    %18 = vector.broadcast %17 : vector<1x128xf32> to vector<8x128xf32>
    %19 = arith.addf %16, %18 : vector<8x128xf32>
    %cst_17 = arith.constant 0.000000e+00 : f32
    %20 = vector.broadcast %cst_17 : f32 to vector<8x128xf32>
    %21 = arith.maximumf %19, %20 : vector<8x128xf32>
    %c0_18 = arith.constant 0 : index
    %c0_19 = arith.constant 0 : index
    %22 = vector.load %arg8[%c0_18, %c0_19] : memref<1x128xf32, #tpu.memory_space<vmem>>, vector<1x128xf32>
    %cst_20 = arith.constant dense<0.000000e+00> : vector<1x8xf32>
    %23 = tpu.matmul %22, %21, %cst_20 {dimension_numbers = #tpu.dot_dimension_numbers<[1], [1], [0], [0], [0, 0, 1, 0], [], []>} : vector<1x128xf32>, vector<8x128xf32>, vector<1x8xf32> -> vector<1x8xf32>
    %c0_21 = arith.constant 0 : index
    %c0_22 = arith.constant 0 : index
    %24 = vector.load %arg9[%c0_21, %c0_22] : memref<1x1xf32, #tpu.memory_space<vmem>>, vector<1x1xf32>
    %25 = vector.broadcast %24 : vector<1x1xf32> to vector<1x8xf32>
    %26 = arith.addf %23, %25 : vector<1x8xf32>
    %c0_23 = arith.constant 0 : index
    %c0_24 = arith.constant 0 : index
    %27 = vector.load %arg10[%c0_23, %c0_24] : memref<1x8xf32, #tpu.memory_space<vmem>>, vector<1x8xf32>
    tpu.vector_store %arg10[%c0_23, %c0_24], %26 {strides = array<i32>} : memref<1x8xf32, #tpu.memory_space<vmem>>, vector<1x8xf32>,
    return
  }
  func.func @transform_0(%arg0: i32) -> (i32, i32) {
    %c0_i32 = arith.constant 0 : i32
    %c0_i32_0 = arith.constant 0 : i32
    return %arg0, %c0_i32 : i32, i32
  }
  func.func @transform_1(%arg0: i32) -> (i32, i32) {
    %c0_i32 = arith.constant 0 : i32
    %c0_i32_0 = arith.constant 0 : i32
    %c0_i32_1 = arith.constant 0 : i32
    return %c0_i32, %c0_i32_0 : i32, i32
  }
  func.func @transform_2(%arg0: i32) -> (i32, i32) {
    %c0_i32 = arith.constant 0 : i32
    %c0_i32_0 = arith.constant 0 : i32
    %c0_i32_1 = arith.constant 0 : i32
    return %c0_i32, %c0_i32_0 : i32, i32
  }
  func.func @transform_3(%arg0: i32) -> (i32, i32) {
    %c0_i32 = arith.constant 0 : i32
    %c0_i32_0 = arith.constant 0 : i32
    %c0_i32_1 = arith.constant 0 : i32
    return %c0_i32, %c0_i32_0 : i32, i32
  }
  func.func @transform_4(%arg0: i32) -> (i32, i32) {
    %c0_i32 = arith.constant 0 : i32
    %c0_i32_0 = arith.constant 0 : i32
    %c0_i32_1 = arith.constant 0 : i32
    return %c0_i32, %c0_i32_0 : i32, i32
  }
  func.func @transform_5(%arg0: i32) -> (i32, i32) {
    %c0_i32 = arith.constant 0 : i32
    %c0_i32_0 = arith.constant 0 : i32
    %c0_i32_1 = arith.constant 0 : i32
    return %c0_i32, %c0_i32_0 : i32, i32
  }
  func.func @transform_6(%arg0: i32) -> (i32, i32) {
    %c0_i32 = arith.constant 0 : i32
    %c0_i32_0 = arith.constant 0 : i32
    %c0_i32_1 = arith.constant 0 : i32
    return %c0_i32, %c0_i32_0 : i32, i32
  }
  func.func @transform_7(%arg0: i32) -> (i32, i32) {
    %c0_i32 = arith.constant 0 : i32
    %c0_i32_0 = arith.constant 0 : i32
    %c0_i32_1 = arith.constant 0 : i32
    return %c0_i32, %c0_i32_0 : i32, i32
  }
  func.func @transform_8(%arg0: i32) -> (i32, i32) {
    %c0_i32 = arith.constant 0 : i32
    %c0_i32_0 = arith.constant 0 : i32
    %c0_i32_1 = arith.constant 0 : i32
    return %c0_i32, %c0_i32_0 : i32, i32
  }
  func.func @transform_9(%arg0: i32) -> (i32, i32) {
    %c0_i32 = arith.constant 0 : i32
    %c0_i32_0 = arith.constant 0 : i32
    return %c0_i32, %arg0 : i32, i32
  }
}

</mosaic_0001>

<llo_original>
// kernel: critic_forward.1
$region0: #{critic_forward.1}
  #allocation0 [shape = 'u32[]', space=smem, size = 0x4, offset = 0x4, fixed_abs, tag = 'smem constant byte address 0x4 - core index']
  #allocation1 [shape = 'u32[144,128]{1,0:T(1,128)}', space=vmem, size = 0x12000, scoped, tag = 'internal scratch']
  #allocation2 [shape = 'f32[1,1]{1,0:T(1,128)S(1)}', space=vmem, size = 0x200, scoped, tag = 'scoped memory for critic_forward.1']
  %s0 = inlined_call_operand.hbm [shape: f32[8,32], index: 0, kind: input, shape index: {}]
  %s1 = inlined_call_operand.hbm [shape: f32[32,384], index: 1, kind: input, shape index: {}]
  %s2 = inlined_call_operand.vmem [shape: f32[1,384], index: 2, kind: input, shape index: {}]
  %s3 = inlined_call_operand.hbm [shape: f32[384,128], index: 3, kind: input, shape index: {}]
  %s4 = inlined_call_operand.vmem [shape: f32[1,128], index: 4, kind: input, shape index: {}]
  %s5 = inlined_call_operand.hbm [shape: f32[128,128], index: 5, kind: input, shape index: {}]
  %s6 = inlined_call_operand.vmem [shape: f32[1,128], index: 6, kind: input, shape index: {}]
  %s7 = inlined_call_operand.vmem [shape: f32[1,128], index: 7, kind: input, shape index: {}]
  %s8 = inlined_call_operand.<no memory space> [shape: f32[1,1], index: 8, kind: input, shape index: {}]
  %s9 = inlined_call_operand.hbm [shape: f32[1,8], index: 9, kind: output, shape index: {}]
  %s10 = sld [smem:[#allocation0]]
  $region62: #{critic_forward.1} parent=0
    _
  %s12 = ssub.s32 1, %s10
  %s13 = scalar_select 0, %s12, %s10
  %v14 = vstv %s8
  %15 = vst [vmem:[#allocation2] sm:$0x1] %v14
  $region1: #{critic_forward.1} parent=0
    #allocation3 [shape = 'u8[4096]{0}', space=vmem, size = 0x1000, scoped, tag = 'input window, operand 0, single buffered']
    #allocation4 [shape = 's32[1]{0}', space=sflag, size = 0x4, scoped, tag = 'scoped memory for critic_forward.1']
    #allocation5 [shape = 's32[1]{0}', space=sflag, size = 0x4, scoped, tag = 'scoped memory for critic_forward.1']
    #allocation6 [shape = 'u8[49152]{0}', space=vmem, size = 0xc000, scoped, tag = 'input window, operand 1, single buffered']
    #allocation7 [shape = 's32[1]{0}', space=sflag, size = 0x4, scoped, tag = 'scoped memory for critic_forward.1']
    #allocation8 [shape = 'u8[196608]{0}', space=vmem, size = 0x30000, scoped, tag = 'input window, operand 3, single buffered']
    #allocation9 [shape = 'u8[65536]{0}', space=vmem, size = 0x10000, scoped, tag = 'input window, operand 5, single buffered']
    #allocation10 [shape = 's32[1]{0}', space=sflag, size = 0x4, scoped, tag = 'scoped memory for critic_forward.1']
    #allocation11 [shape = 'u8[512]{0}', space=vmem, size = 0x400, scoped, tag = 'output window, operand 0, single buffered']
    %16 = vsyncpa [#allocation4], 0
    %17 = vsyncpa [#allocation7], 0
    %18 = vsyncpa [#allocation10], 0
    %19 = vsyncpa [#allocation5], 0
    // Predicated region
    $region2: #{critic_forward.1} parent=1 // pred_check
      _
    $region3: #{critic_forward.1} parent=1 // pred_check_branch
      %21 = sbr.rel (0) target = $region5
    $region4: #{critic_forward.1} parent=1 // pred_region
      %s23 = ssub.s32 128, 128
      %24 = vsyncadd [#allocation4], %s23
      %s26 = sshll.u32 [#allocation3], 4
      %s27 = int_to_ptr.vmem [resolvable:$true] %s26
      %29 = dma.hbm_to_vmem [thread:$0]  %s0, 128, %s27, [#allocation4]
    $region5: #{critic_forward.1} parent=1 // pred_fallthru
      _
    // Predicated region
    $region6: #{critic_forward.1} parent=1 // pred_check
      _
    $region7: #{critic_forward.1} parent=1 // pred_check_branch
      %31 = sbr.rel (0) target = $region9
    $region8: #{critic_forward.1} parent=1 // pred_region
      %s33 = ssub.s32 1536, 1536
      %34 = vsyncadd [#allocation7], %s33
      %s35 = sshll.u32 [#allocation6], 4
      %s36 = int_to_ptr.vmem [resolvable:$true] %s35
      %41 = dma.hbm_to_vmem [thread:$0]  %s1, 1536, %s36, [#allocation7], 384, 384, 24
    $region9: #{critic_forward.1} parent=1 // pred_fallthru
      _
    // Predicated region
    $region10: #{critic_forward.1} parent=1 // pred_check
      _
    $region11: #{critic_forward.1} parent=1 // pred_check_branch
      %43 = sbr.rel (0) target = $region13
    $region12: #{critic_forward.1} parent=1 // pred_region
      _
    $region13: #{critic_forward.1} parent=1 // pred_fallthru
      _
    // Predicated region
    $region14: #{critic_forward.1} parent=1 // pred_check
      _
    $region15: #{critic_forward.1} parent=1 // pred_check_branch
      %45 = sbr.rel (0) target = $region17
    $region16: #{critic_forward.1} parent=1 // pred_region
      %s47 = ssub.s32 6144, 6144
      %48 = vsyncadd [#allocation7], %s47
      %s49 = sshll.u32 [#allocation8], 4
      %s50 = int_to_ptr.vmem [resolvable:$true] %s49
      %55 = dma.hbm_to_vmem [thread:$0]  %s3, 6144, %s50, [#allocation7], 128, 128, 8
    $region17: #{critic_forward.1} parent=1 // pred_fallthru
      _
    // Predicated region
    $region18: #{critic_forward.1} parent=1 // pred_check
      _
    $region19: #{critic_forward.1} parent=1 // pred_check_branch
      %57 = sbr.rel (0) target = $region21
    $region20: #{critic_forward.1} parent=1 // pred_region
      _
    $region21: #{critic_forward.1} parent=1 // pred_fallthru
      _
    // Predicated region
    $region22: #{critic_forward.1} parent=1 // pred_check
      _
    $region23: #{critic_forward.1} parent=1 // pred_check_branch
      %59 = sbr.rel (0) target = $region25
    $region24: #{critic_forward.1} parent=1 // pred_region
      %s61 = ssub.s32 2048, 2048
      %62 = vsyncadd [#allocation10], %s61
      %s63 = sshll.u32 [#allocation9], 4
      %s64 = int_to_ptr.vmem [resolvable:$true] %s63
      %69 = dma.hbm_to_vmem [thread:$0]  %s5, 2048, %s64, [#allocation10], 128, 128, 8
    $region25: #{critic_forward.1} parent=1 // pred_fallthru
      _
    // Predicated region
    $region26: #{critic_forward.1} parent=1 // pred_check
      _
    $region27: #{critic_forward.1} parent=1 // pred_check_branch
      %71 = sbr.rel (0) target = $region29
    $region28: #{critic_forward.1} parent=1 // pred_region
      _
    $region29: #{critic_forward.1} parent=1 // pred_fallthru
      _
    // Predicated region
    $region30: #{critic_forward.1} parent=1 // pred_check
      _
    $region31: #{critic_forward.1} parent=1 // pred_check_branch
      %73 = sbr.rel (0) target = $region33
    $region32: #{critic_forward.1} parent=1 // pred_region
      _
    $region33: #{critic_forward.1} parent=1 // pred_fallthru
      _
    // Predicated region
    $region34: #{critic_forward.1} parent=1 // pred_check
      _
    $region35: #{critic_forward.1} parent=1 // pred_check_branch
      %75 = sbr.rel (0) target = $region37
    $region36: #{critic_forward.1} parent=1 // pred_region
      _
    $region37: #{critic_forward.1} parent=1 // pred_fallthru
      _
    // Predicated region
    $region38: #{critic_forward.1} parent=1 // pred_check
      _
    $region39: #{critic_forward.1} parent=1 // pred_check_branch
      %77 = sbr.rel (0) target = $region41
    $region40: #{critic_forward.1} parent=1 // pred_region
      %78 = dma.done [#allocation4], 128
    $region41: #{critic_forward.1} parent=1 // pred_fallthru
      _
    // Predicated region
    $region42: #{critic_forward.1} parent=1 // pred_check
      _
    $region43: #{critic_forward.1} parent=1 // pred_check_branch
      %80 = sbr.rel (0) target = $region45
    $region44: #{critic_forward.1} parent=1 // pred_region
      %81 = dma.done [#allocation7], 1536
    $region45: #{critic_forward.1} parent=1 // pred_fallthru
      _
    // Predicated region
    $region46: #{critic_forward.1} parent=1 // pred_check
      _
    $region47: #{critic_forward.1} parent=1 // pred_check_branch
      %83 = sbr.rel (0) target = $region49
    $region48: #{critic_forward.1} parent=1 // pred_region
      %84 = dma.done [#allocation7], 6144
    $region49: #{critic_forward.1} parent=1 // pred_fallthru
      _
    // Predicated region
    $region50: #{critic_forward.1} parent=1 // pred_check
      _
    $region51: #{critic_forward.1} parent=1 // pred_check_branch
      %86 = sbr.rel (0) target = $region53
    $region52: #{critic_forward.1} parent=1 // pred_region
      %87 = dma.done [#allocation10], 2048
    $region53: #{critic_forward.1} parent=1 // pred_fallthru
      _
    %v88 = vld [vmem:[#allocation3] sm:$0xff]
    %v89 = vld [vmem:[#allocation6] sm:$0xff]
    %v90 = vld [vmem:[#allocation6 + $0x8] sm:$0xff]
    %v91 = vld [vmem:[#allocation6 + $0x10] sm:$0xff]
    %v92 = vld [vmem:[#allocation6 + $0x18] sm:$0xff]
    %v93 = vld [vmem:[#allocation6 + $0x20] sm:$0xff]
    %v94 = vld [vmem:[#allocation6 + $0x28] sm:$0xff]
    %v95 = vld [vmem:[#allocation6 + $0x30] sm:$0xff]
    %v96 = vld [vmem:[#allocation6 + $0x38] sm:$0xff]
    %v97 = vld [vmem:[#allocation6 + $0x40] sm:$0xff]
    %v98 = vld [vmem:[#allocation6 + $0x48] sm:$0xff]
    %v99 = vld [vmem:[#allocation6 + $0x50] sm:$0xff]
    %v100 = vld [vmem:[#allocation6 + $0x58] sm:$0xff]
    %v101 = vld [vmem:[%s2] sm:$0x7]
    %v103 = vlaneseq
    %v104 = vshrl.u32 %v103, 7
    %v105 = vsub.s32 0, %v104
    %v106 = vrot.slane %v101, %v105
    %v107 = vlaneseq
    %v108 = vshrl.u32 %v107, 7
    %v109 = vsub.s32 1, %v108
    %v110 = vrot.slane %v101, %v109
    %v111 = vlaneseq
    %v112 = vshrl.u32 %v111, 7
    %v113 = vsub.s32 2, %v112
    %v114 = vrot.slane %v101, %v113
    %vm118 = vcmask 261120
    %v120 = vsel %vm118, %v88, 0
    %122 = vmatprep.subr.mxu0 %v90
    %123 = vmatpush1.msra.mxu0 %v89
    %124 = vmatprep.subr.mxu0 %v93
    %125 = vmatpush1.msra.mxu0 %v92
    %126 = vmatprep.subr.mxu0 %v96
    %127 = vmatpush1.msra.mxu0 %v95
    %128 = vmatprep.subr.mxu0 %v99
    %129 = vmatpush1.msra.mxu0 %v98
    %130 = vmatprep.subr.mxu0 0.0
    %131 = vmatpush1.msra.mxu0 0.0
    %132 = vmatprep.subr.mxu0 0.0
    %133 = vmatpush1.msra.mxu0 0.0
    %134 = vmatprep.subr.mxu0 0.0
    %135 = vmatpush1.msra.mxu0 0.0
    %136 = vmatprep.subr.mxu0 0.0
    %137 = vmatpush1.msra.mxu0 0.0
    %138 = vmatprep.subr.mxu0 0.0
    %139 = vmatpush1.msra.mxu0 0.0
    %140 = vmatprep.subr.mxu0 0.0
    %141 = vmatpush1.msra.mxu0 0.0
    %142 = vmatprep.subr.mxu0 0.0
    %143 = vmatpush1.msra.mxu0 0.0
    %144 = vmatprep.subr.mxu0 0.0
    %145 = vmatpush1.msra.mxu0 0.0
    %146 = vmatprep.subr.mxu0 0.0
    %147 = vmatpush1.msra.mxu0 0.0
    %148 = vmatprep.subr.mxu0 0.0
    %149 = vmatpush1.msra.mxu0 0.0
    %150 = vmatprep.subr.mxu0 0.0
    %151 = vmatpush1.msra.mxu0 0.0
    %152 = vmatprep.subr.mxu0 0.0
    %153 = vmatpush1.msra.mxu0 0.0
    %154 = vmatprep.subr.mxu0 0.0
    %155 = vmatpush1.msra.mxu0 0.0
    %156 = vmatprep.subr.mxu0 0.0
    %157 = vmatpush1.msra.mxu0 0.0
    %158 = vmatprep.subr.mxu0 0.0
    %159 = vmatpush1.msra.mxu0 0.0
    %160 = vmatprep.subr.mxu0 0.0
    %161 = vmatpush1.msra.mxu0 0.0
    %162 = vmatprep.subr.mxu0 0.0
    %163 = vmatpush1.msra.mxu0 0.0
    %164 = vmatprep.subr.mxu0 0.0
    %165 = vmatpush1.msra.mxu0 0.0
    %166 = vmatprep.subr.mxu0 0.0
    %167 = vmatpush1.msra.mxu0 0.0
    %168 = vmatprep.subr.mxu0 0.0
    %169 = vmatpush1.msra.mxu0 0.0
    %170 = vmatprep.subr.mxu0 0.0
    %171 = vmatpush1.msra.mxu0 0.0
    %172 = vmatprep.subr.mxu0 0.0
    %173 = vmatpush1.msra.mxu0 0.0
    %174 = vmatprep.subr.mxu0 0.0
    %175 = vmatpush1.msra.mxu0 0.0
    %176 = vmatprep.subr.mxu0 0.0
    %177 = vmatpush1.msra.mxu0 0.0
    %178 = vmatprep.subr.mxu0 0.0
    %179 = vmatpush1.msra.mxu0 0.0
    %180 = vmatprep.subr.mxu0 0.0
    %181 = vmatpush1.msra.mxu0 0.0
    %182 = vmatprep.subr.mxu0 0.0
    %183 = vmatpush1.msra.mxu0 0.0
    %184 = vmatprep.subr.mxu0 0.0
    %185 = vmatpush1.msra.mxu0 0.0
    %186 = vmatprep.mubr.f32.mxu0 0.0
    %187 = vmatmul.mubr.f32.gmra.mrb[0].mxu0 %v120
    %v188 = vpop.f32.mrb[0].mxu0
    %v189 = vadd.f32 %v106, %v188
    %v190 = vpop.f32.mrb[0].mxu0
    %v191 = vadd.f32 %v110, %v190
    %192 = vdwg.mxu0
    %193 = vmatprep.subr.mxu0 0.0
    %194 = vmatpush1.msra.mxu0 %v91
    %195 = vmatprep.subr.mxu0 0.0
    %196 = vmatpush1.msra.mxu0 %v94
    %197 = vmatprep.subr.mxu0 0.0
    %198 = vmatpush1.msra.mxu0 %v97
    %199 = vmatprep.subr.mxu0 0.0
    %200 = vmatpush1.msra.mxu0 %v100
    %201 = vmatprep.subr.mxu0 0.0
    %202 = vmatpush1.msra.mxu0 0.0
    %203 = vmatprep.subr.mxu0 0.0
    %204 = vmatpush1.msra.mxu0 0.0
    %205 = vmatprep.subr.mxu0 0.0
    %206 = vmatpush1.msra.mxu0 0.0
    %207 = vmatprep.subr.mxu0 0.0
    %208 = vmatpush1.msra.mxu0 0.0
    %209 = vmatprep.subr.mxu0 0.0
    %210 = vmatpush1.msra.mxu0 0.0
    %211 = vmatprep.subr.mxu0 0.0
    %212 = vmatpush1.msra.mxu0 0.0
    %213 = vmatprep.subr.mxu0 0.0
    %214 = vmatpush1.msra.mxu0 0.0
    %215 = vmatprep.subr.mxu0 0.0
    %216 = vmatpush1.msra.mxu0 0.0
    %217 = vmatprep.subr.mxu0 0.0
    %218 = vmatpush1.msra.mxu0 0.0
    %219 = vmatprep.subr.mxu0 0.0
    %220 = vmatpush1.msra.mxu0 0.0
    %221 = vmatprep.subr.mxu0 0.0
    %222 = vmatpush1.msra.mxu0 0.0
    %223 = vmatprep.subr.mxu0 0.0
    %224 = vmatpush1.msra.mxu0 0.0
    %225 = vmatprep.subr.mxu0 0.0
    %226 = vmatpush1.msra.mxu0 0.0
    %227 = vmatprep.subr.mxu0 0.0
    %228 = vmatpush1.msra.mxu0 0.0
    %229 = vmatprep.subr.mxu0 0.0
    %230 = vmatpush1.msra.mxu0 0.0
    %231 = vmatprep.subr.mxu0 0.0
    %232 = vmatpush1.msra.mxu0 0.0
    %233 = vmatprep.subr.mxu0 0.0
    %234 = vmatpush1.msra.mxu0 0.0
    %235 = vmatprep.subr.mxu0 0.0
    %236 = vmatpush1.msra.mxu0 0.0
    %237 = vmatprep.subr.mxu0 0.0
    %238 = vmatpush1.msra.mxu0 0.0
    %239 = vmatprep.subr.mxu0 0.0
    %240 = vmatpush1.msra.mxu0 0.0
    %241 = vmatprep.subr.mxu0 0.0
    %242 = vmatpush1.msra.mxu0 0.0
    %243 = vmatprep.subr.mxu0 0.0
    %244 = vmatpush1.msra.mxu0 0.0
    %245 = vmatprep.subr.mxu0 0.0
    %246 = vmatpush1.msra.mxu0 0.0
    %247 = vmatprep.subr.mxu0 0.0
    %248 = vmatpush1.msra.mxu0 0.0
    %249 = vmatprep.subr.mxu0 0.0
    %250 = vmatpush1.msra.mxu0 0.0
    %251 = vmatprep.subr.mxu0 0.0
    %252 = vmatpush1.msra.mxu0 0.0
    %253 = vmatprep.subr.mxu0 0.0
    %254 = vmatpush1.msra.mxu0 0.0
    %255 = vmatprep.subr.mxu0 0.0
    %256 = vmatpush1.msra.mxu0 0.0
    %257 = vmatprep.mubr.f32.mxu0 0.0
    %258 = vmatmul.mubr.f32.gmra.mrb[0].mxu0 %v120
    %v259 = vpop.f32.mrb[0].mxu0
    %v260 = vadd.f32 %v114, %v259
    %v261 = vpop.f32.mrb[0].mxu0
    %262 = vdwg.mxu0
    %v263 = vmax.f32 %v189, 0.0
    %v264 = vmax.f32 %v191, 0.0
    %v265 = vmax.f32 %v260, 0.0
    %v266 = vld [vmem:[#allocation8] sm:$0xff]
    %v267 = vld [vmem:[#allocation8 + $0x8] sm:$0xff]
    %v268 = vld [vmem:[#allocation8 + $0x10] sm:$0xff]
    %v269 = vld [vmem:[#allocation8 + $0x18] sm:$0xff]
    %v270 = vld [vmem:[#allocation8 + $0x20] sm:$0xff]
    %v271 = vld [vmem:[#allocation8 + $0x28] sm:$0xff]
    %v272 = vld [vmem:[#allocation8 + $0x30] sm:$0xff]
    %v273 = vld [vmem:[#allocation8 + $0x38] sm:$0xff]
    %v274 = vld [vmem:[#allocation8 + $0x40] sm:$0xff]
    %v275 = vld [vmem:[#allocation8 + $0x48] sm:$0xff]
    %v276 = vld [vmem:[#allocation8 + $0x50] sm:$0xff]
    %v277 = vld [vmem:[#allocation8 + $0x58] sm:$0xff]
    %v278 = vld [vmem:[#allocation8 + $0x60] sm:$0xff]
    %v279 = vld [vmem:[#allocation8 + $0x68] sm:$0xff]
    %v280 = vld [vmem:[#allocation8 + $0x70] sm:$0xff]
    %v281 = vld [vmem:[#allocation8 + $0x78] sm:$0xff]
    %v282 = vld [vmem:[#allocation8 + $0x80] sm:$0xff]
    %v283 = vld [vmem:[#allocation8 + $0x88] sm:$0xff]
    %v284 = vld [vmem:[#allocation8 + $0x90] sm:$0xff]
    %v285 = vld [vmem:[#allocation8 + $0x98] sm:$0xff]
    %v286 = vld [vmem:[#allocation8 + $0xa0] sm:$0xff]
    %v287 = vld [vmem:[#allocation8 + $0xa8] sm:$0xff]
    %v288 = vld [vmem:[#allocation8 + $0xb0] sm:$0xff]
    %v289 = vld [vmem:[#allocation8 + $0xb8] sm:$0xff]
    %v290 = vld [vmem:[#allocation8 + $0xc0] sm:$0xff]
    %v291 = vld [vmem:[#allocation8 + $0xc8] sm:$0xff]
    %v292 = vld [vmem:[#allocation8 + $0xd0] sm:$0xff]
    %v293 = vld [vmem:[#allocation8 + $0xd8] sm:$0xff]
    %v294 = vld [vmem:[#allocation8 + $0xe0] sm:$0xff]
    %v295 = vld [vmem:[#allocation8 + $0xe8] sm:$0xff]
    %v296 = vld [vmem:[#allocation8 + $0xf0] sm:$0xff]
    %v297 = vld [vmem:[#allocation8 + $0xf8] sm:$0xff]
    %v298 = vld [vmem:[#allocation8 + $0x100] sm:$0xff]
    %v299 = vld [vmem:[#allocation8 + $0x108] sm:$0xff]
    %v300 = vld [vmem:[#allocation8 + $0x110] sm:$0xff]
    %v301 = vld [vmem:[#allocation8 + $0x118] sm:$0xff]
    %v302 = vld [vmem:[#allocation8 + $0x120] sm:$0xff]
    %v303 = vld [vmem:[#allocation8 + $0x128] sm:$0xff]
    %v304 = vld [vmem:[#allocation8 + $0x130] sm:$0xff]
    %v305 = vld [vmem:[#allocation8 + $0x138] sm:$0xff]
    %v306 = vld [vmem:[#allocation8 + $0x140] sm:$0xff]
    %v307 = vld [vmem:[#allocation8 + $0x148] sm:$0xff]
    %v308 = vld [vmem:[#allocation8 + $0x150] sm:$0xff]
    %v309 = vld [vmem:[#allocation8 + $0x158] sm:$0xff]
    %v310 = vld [vmem:[#allocation8 + $0x160] sm:$0xff]
    %v311 = vld [vmem:[#allocation8 + $0x168] sm:$0xff]
    %v312 = vld [vmem:[#allocation8 + $0x170] sm:$0xff]
    %v313 = vld [vmem:[#allocation8 + $0x178] sm:$0xff]
    %v314 = vld [vmem:[%s4] sm:$0x1]
    %v316 = vlaneseq
    %v317 = vshrl.u32 %v316, 7
    %v318 = vsub.s32 0, %v317
    %v319 = vrot.slane %v314, %v318
    %321 = vmatprep.subr.mxu0 0.0
    %322 = vmatpush1.msra.mxu0 %v266
    %323 = vmatprep.subr.mxu0 0.0
    %324 = vmatpush1.msra.mxu0 %v267
    %325 = vmatprep.subr.mxu0 0.0
    %326 = vmatpush1.msra.mxu0 %v268
    %327 = vmatprep.subr.mxu0 0.0
    %328 = vmatpush1.msra.mxu0 %v269
    %329 = vmatprep.subr.mxu0 0.0
    %330 = vmatpush1.msra.mxu0 %v270
    %331 = vmatprep.subr.mxu0 0.0
    %332 = vmatpush1.msra.mxu0 %v271
    %333 = vmatprep.subr.mxu0 0.0
    %334 = vmatpush1.msra.mxu0 %v272
    %335 = vmatprep.subr.mxu0 0.0
    %336 = vmatpush1.msra.mxu0 %v273
    %337 = vmatprep.subr.mxu0 0.0
    %338 = vmatpush1.msra.mxu0 %v274
    %339 = vmatprep.subr.mxu0 0.0
    %340 = vmatpush1.msra.mxu0 %v275
    %341 = vmatprep.subr.mxu0 0.0
    %342 = vmatpush1.msra.mxu0 %v276
    %343 = vmatprep.subr.mxu0 0.0
    %344 = vmatpush1.msra.mxu0 %v277
    %345 = vmatprep.subr.mxu0 0.0
    %346 = vmatpush1.msra.mxu0 %v278
    %347 = vmatprep.subr.mxu0 0.0
    %348 = vmatpush1.msra.mxu0 %v279
    %349 = vmatprep.subr.mxu0 0.0
    %350 = vmatpush1.msra.mxu0 %v280
    %351 = vmatprep.subr.mxu0 0.0
    %352 = vmatpush1.msra.mxu0 %v281
    %353 = vmatprep.subr.mxu0 0.0
    %354 = vmatpush1.msra.mxu0 %v282
    %355 = vmatprep.subr.mxu0 0.0
    %356 = vmatpush1.msra.mxu0 %v283
    %357 = vmatprep.subr.mxu0 0.0
    %358 = vmatpush1.msra.mxu0 %v284
    %359 = vmatprep.subr.mxu0 0.0
    %360 = vmatpush1.msra.mxu0 %v285
    %361 = vmatprep.subr.mxu0 0.0
    %362 = vmatpush1.msra.mxu0 %v286
    %363 = vmatprep.subr.mxu0 0.0
    %364 = vmatpush1.msra.mxu0 %v287
    %365 = vmatprep.subr.mxu0 0.0
    %366 = vmatpush1.msra.mxu0 %v288
    %367 = vmatprep.subr.mxu0 0.0
    %368 = vmatpush1.msra.mxu0 %v289
    %369 = vmatprep.subr.mxu0 0.0
    %370 = vmatpush1.msra.mxu0 %v290
    %371 = vmatprep.subr.mxu0 0.0
    %372 = vmatpush1.msra.mxu0 %v291
    %373 = vmatprep.subr.mxu0 0.0
    %374 = vmatpush1.msra.mxu0 %v292
    %375 = vmatprep.subr.mxu0 0.0
    %376 = vmatpush1.msra.mxu0 %v293
    %377 = vmatprep.subr.mxu0 0.0
    %378 = vmatpush1.msra.mxu0 %v294
    %379 = vmatprep.subr.mxu0 0.0
    %380 = vmatpush1.msra.mxu0 %v295
    %381 = vmatprep.subr.mxu0 0.0
    %382 = vmatpush1.msra.mxu0 %v296
    %383 = vmatprep.subr.mxu0 0.0
    %384 = vmatpush1.msra.mxu0 %v297
    %385 = vmatprep.mubr.f32.mxu0 %v264
    %386 = vmatmul.mubr.f32.gmra.mrb[0].mxu0 %v263
    %v387 = vpop.f32.mrb[0].mxu0
    %v388 = vadd.f32 %v319, %v387
    %v389 = vpop.f32.mrb[0].mxu0
    %390 = vdwg.mxu0
    %391 = vmatprep.subr.mxu0 0.0
    %392 = vmatpush1.msra.mxu0 %v298
    %393 = vmatprep.subr.mxu0 0.0
    %394 = vmatpush1.msra.mxu0 %v299
    %395 = vmatprep.subr.mxu0 0.0
    %396 = vmatpush1.msra.mxu0 %v300
    %397 = vmatprep.subr.mxu0 0.0
    %398 = vmatpush1.msra.mxu0 %v301
    %399 = vmatprep.subr.mxu0 0.0
    %400 = vmatpush1.msra.mxu0 %v302
    %401 = vmatprep.subr.mxu0 0.0
    %402 = vmatpush1.msra.mxu0 %v303
    %403 = vmatprep.subr.mxu0 0.0
    %404 = vmatpush1.msra.mxu0 %v304
    %405 = vmatprep.subr.mxu0 0.0
    %406 = vmatpush1.msra.mxu0 %v305
    %407 = vmatprep.subr.mxu0 0.0
    %408 = vmatpush1.msra.mxu0 %v306
    %409 = vmatprep.subr.mxu0 0.0
    %410 = vmatpush1.msra.mxu0 %v307
    %411 = vmatprep.subr.mxu0 0.0
    %412 = vmatpush1.msra.mxu0 %v308
    %413 = vmatprep.subr.mxu0 0.0
    %414 = vmatpush1.msra.mxu0 %v309
    %415 = vmatprep.subr.mxu0 0.0
    %416 = vmatpush1.msra.mxu0 %v310
    %417 = vmatprep.subr.mxu0 0.0
    %418 = vmatpush1.msra.mxu0 %v311
    %419 = vmatprep.subr.mxu0 0.0
    %420 = vmatpush1.msra.mxu0 %v312
    %421 = vmatprep.subr.mxu0 0.0
    %422 = vmatpush1.msra.mxu0 %v313
    %423 = vmatprep.subr.mxu0 0.0
    %424 = vmatpush1.msra.mxu0 0.0
    %425 = vmatprep.subr.mxu0 0.0
    %426 = vmatpush1.msra.mxu0 0.0
    %427 = vmatprep.subr.mxu0 0.0
    %428 = vmatpush1.msra.mxu0 0.0
    %429 = vmatprep.subr.mxu0 0.0
    %430 = vmatpush1.msra.mxu0 0.0
    %431 = vmatprep.subr.mxu0 0.0
    %432 = vmatpush1.msra.mxu0 0.0
    %433 = vmatprep.subr.mxu0 0.0
    %434 = vmatpush1.msra.mxu0 0.0
    %435 = vmatprep.subr.mxu0 0.0
    %436 = vmatpush1.msra.mxu0 0.0
    %437 = vmatprep.subr.mxu0 0.0
    %438 = vmatpush1.msra.mxu0 0.0
    %439 = vmatprep.subr.mxu0 0.0
    %440 = vmatpush1.msra.mxu0 0.0
    %441 = vmatprep.subr.mxu0 0.0
    %442 = vmatpush1.msra.mxu0 0.0
    %443 = vmatprep.subr.mxu0 0.0
    %444 = vmatpush1.msra.mxu0 0.0
    %445 = vmatprep.subr.mxu0 0.0
    %446 = vmatpush1.msra.mxu0 0.0
    %447 = vmatprep.subr.mxu0 0.0
    %448 = vmatpush1.msra.mxu0 0.0
    %449 = vmatprep.subr.mxu0 0.0
    %450 = vmatpush1.msra.mxu0 0.0
    %451 = vmatprep.subr.mxu0 0.0
    %452 = vmatpush1.msra.mxu0 0.0
    %453 = vmatprep.subr.mxu0 0.0
    %454 = vmatpush1.msra.mxu0 0.0
    %455 = vmatprep.mubr.f32.mxu0 0.0
    %456 = vmatmul.mubr.f32.gmra.mrb[0].mxu0 %v265
    %v457 = vpop.f32.mrb[0].mxu0
    %v458 = vadd.f32 %v388, %v457
    %v459 = vpop.f32.mrb[0].mxu0
    %460 = vdwg.mxu0
    %v461 = vmax.f32 %v458, 0.0
    %v462 = vld [vmem:[#allocation9] sm:$0xff]
    %v463 = vld [vmem:[#allocation9 + $0x8] sm:$0xff]
    %v464 = vld [vmem:[#allocation9 + $0x10] sm:$0xff]
    %v465 = vld [vmem:[#allocation9 + $0x18] sm:$0xff]
    %v466 = vld [vmem:[#allocation9 + $0x20] sm:$0xff]
    %v467 = vld [vmem:[#allocation9 + $0x28] sm:$0xff]
    %v468 = vld [vmem:[#allocation9 + $0x30] sm:$0xff]
    %v469 = vld [vmem:[#allocation9 + $0x38] sm:$0xff]
    %v470 = vld [vmem:[#allocation9 + $0x40] sm:$0xff]
    %v471 = vld [vmem:[#allocation9 + $0x48] sm:$0xff]
    %v472 = vld [vmem:[#allocation9 + $0x50] sm:$0xff]
    %v473 = vld [vmem:[#allocation9 + $0x58] sm:$0xff]
    %v474 = vld [vmem:[#allocation9 + $0x60] sm:$0xff]
    %v475 = vld [vmem:[#allocation9 + $0x68] sm:$0xff]
    %v476 = vld [vmem:[#allocation9 + $0x70] sm:$0xff]
    %v477 = vld [vmem:[#allocation9 + $0x78] sm:$0xff]
    %v478 = vld [vmem:[%s6] sm:$0x1]
    %v480 = vlaneseq
    %v481 = vshrl.u32 %v480, 7
    %v482 = vsub.s32 0, %v481
    %v483 = vrot.slane %v478, %v482
    %485 = vmatprep.subr.mxu0 0.0
    %486 = vmatpush1.msra.mxu0 %v462
    %487 = vmatprep.subr.mxu0 0.0
    %488 = vmatpush1.msra.mxu0 %v463
    %489 = vmatprep.subr.mxu0 0.0
    %490 = vmatpush1.msra.mxu0 %v464
    %491 = vmatprep.subr.mxu0 0.0
    %492 = vmatpush1.msra.mxu0 %v465
    %493 = vmatprep.subr.mxu0 0.0
    %494 = vmatpush1.msra.mxu0 %v466
    %495 = vmatprep.subr.mxu0 0.0
    %496 = vmatpush1.msra.mxu0 %v467
    %497 = vmatprep.subr.mxu0 0.0
    %498 = vmatpush1.msra.mxu0 %v468
    %499 = vmatprep.subr.mxu0 0.0
    %500 = vmatpush1.msra.mxu0 %v469
    %501 = vmatprep.subr.mxu0 0.0
    %502 = vmatpush1.msra.mxu0 %v470
    %503 = vmatprep.subr.mxu0 0.0
    %504 = vmatpush1.msra.mxu0 %v471
    %505 = vmatprep.subr.mxu0 0.0
    %506 = vmatpush1.msra.mxu0 %v472
    %507 = vmatprep.subr.mxu0 0.0
    %508 = vmatpush1.msra.mxu0 %v473
    %509 = vmatprep.subr.mxu0 0.0
    %510 = vmatpush1.msra.mxu0 %v474
    %511 = vmatprep.subr.mxu0 0.0
    %512 = vmatpush1.msra.mxu0 %v475
    %513 = vmatprep.subr.mxu0 0.0
    %514 = vmatpush1.msra.mxu0 %v476
    %515 = vmatprep.subr.mxu0 0.0
    %516 = vmatpush1.msra.mxu0 %v477
    %517 = vmatprep.subr.mxu0 0.0
    %518 = vmatpush1.msra.mxu0 0.0
    %519 = vmatprep.subr.mxu0 0.0
    %520 = vmatpush1.msra.mxu0 0.0
    %521 = vmatprep.subr.mxu0 0.0
    %522 = vmatpush1.msra.mxu0 0.0
    %523 = vmatprep.subr.mxu0 0.0
    %524 = vmatpush1.msra.mxu0 0.0
    %525 = vmatprep.subr.mxu0 0.0
    %526 = vmatpush1.msra.mxu0 0.0
    %527 = vmatprep.subr.mxu0 0.0
    %528 = vmatpush1.msra.mxu0 0.0
    %529 = vmatprep.subr.mxu0 0.0
    %530 = vmatpush1.msra.mxu0 0.0
    %531 = vmatprep.subr.mxu0 0.0
    %532 = vmatpush1.msra.mxu0 0.0
    %533 = vmatprep.subr.mxu0 0.0
    %534 = vmatpush1.msra.mxu0 0.0
    %535 = vmatprep.subr.mxu0 0.0
    %536 = vmatpush1.msra.mxu0 0.0
    %537 = vmatprep.subr.mxu0 0.0
    %538 = vmatpush1.msra.mxu0 0.0
    %539 = vmatprep.subr.mxu0 0.0
    %540 = vmatpush1.msra.mxu0 0.0
    %541 = vmatprep.subr.mxu0 0.0
    %542 = vmatpush1.msra.mxu0 0.0
    %543 = vmatprep.subr.mxu0 0.0
    %544 = vmatpush1.msra.mxu0 0.0
    %545 = vmatprep.subr.mxu0 0.0
    %546 = vmatpush1.msra.mxu0 0.0
    %547 = vmatprep.subr.mxu0 0.0
    %548 = vmatpush1.msra.mxu0 0.0
    %549 = vmatprep.mubr.f32.mxu0 0.0
    %550 = vmatmul.mubr.f32.gmra.mrb[0].mxu0 %v461
    %v551 = vpop.f32.mrb[0].mxu0
    %v552 = vadd.f32 %v483, %v551
    %v553 = vpop.f32.mrb[0].mxu0
    %554 = vdwg.mxu0
    %v555 = vmax.f32 %v552, 0.0
    %v556 = vld [vmem:[%s7] sm:$0x1]
    %v557 = vld [vmem:[#allocation2] sm:$0x1]
    %559 = vset.pattern.permute.xlu0 0
    %560 = vperm.xlu0 %559, %v557
    %v561 = vpop.permute.xlu0 %560
    %v563 = vlaneseq
    %v564 = vshrl.u32 %v563, 7
    %v565 = vsub.s32 0, %v564
    %v566 = vrot.slane %v561, %v565
    %567 = vmatprep.subr.mxu0 0.0
    %568 = vmatpush1.xpose.msra.mxu0 %v555
    %569 = vmatprep.subr.mxu0 0.0
    %570 = vmatpush1.xpose.msra.mxu0 0.0
    %571 = vmatprep.subr.mxu0 0.0
    %572 = vmatpush1.xpose.msra.mxu0 0.0
    %573 = vmatprep.subr.mxu0 0.0
    %574 = vmatpush1.xpose.msra.mxu0 0.0
    %575 = vmatprep.subr.mxu0 0.0
    %576 = vmatpush1.xpose.msra.mxu0 0.0
    %577 = vmatprep.subr.mxu0 0.0
    %578 = vmatpush1.xpose.msra.mxu0 0.0
    %579 = vmatprep.subr.mxu0 0.0
    %580 = vmatpush1.xpose.msra.mxu0 0.0
    %581 = vmatprep.subr.mxu0 0.0
    %582 = vmatpush1.xpose.msra.mxu0 0.0
    %583 = vmatprep.subr.mxu0 0.0
    %584 = vmatpush1.xpose.msra.mxu0 0.0
    %585 = vmatprep.subr.mxu0 0.0
    %586 = vmatpush1.xpose.msra.mxu0 0.0
    %587 = vmatprep.subr.mxu0 0.0
    %588 = vmatpush1.xpose.msra.mxu0 0.0
    %589 = vmatprep.subr.mxu0 0.0
    %590 = vmatpush1.xpose.msra.mxu0 0.0
    %591 = vmatprep.subr.mxu0 0.0
    %592 = vmatpush1.xpose.msra.mxu0 0.0
    %593 = vmatprep.subr.mxu0 0.0
    %594 = vmatpush1.xpose.msra.mxu0 0.0
    %595 = vmatprep.subr.mxu0 0.0
    %596 = vmatpush1.xpose.msra.mxu0 0.0
    %597 = vmatprep.subr.mxu0 0.0
    %598 = vmatpush1.xpose.msra.mxu0 0.0
    %599 = vmatprep.subr.mxu0 0.0
    %600 = vmatpush1.xpose.msra.mxu0 0.0
    %601 = vmatprep.subr.mxu0 0.0
    %602 = vmatpush1.xpose.msra.mxu0 0.0
    %603 = vmatprep.subr.mxu0 0.0
    %604 = vmatpush1.xpose.msra.mxu0 0.0
    %605 = vmatprep.subr.mxu0 0.0
    %606 = vmatpush1.xpose.msra.mxu0 0.0
    %607 = vmatprep.subr.mxu0 0.0
    %608 = vmatpush1.xpose.msra.mxu0 0.0
    %609 = vmatprep.subr.mxu0 0.0
    %610 = vmatpush1.xpose.msra.mxu0 0.0
    %611 = vmatprep.subr.mxu0 0.0
    %612 = vmatpush1.xpose.msra.mxu0 0.0
    %613 = vmatprep.subr.mxu0 0.0
    %614 = vmatpush1.xpose.msra.mxu0 0.0
    %615 = vmatprep.subr.mxu0 0.0
    %616 = vmatpush1.xpose.msra.mxu0 0.0
    %617 = vmatprep.subr.mxu0 0.0
    %618 = vmatpush1.xpose.msra.mxu0 0.0
    %619 = vmatprep.subr.mxu0 0.0
    %620 = vmatpush1.xpose.msra.mxu0 0.0
    %621 = vmatprep.subr.mxu0 0.0
    %622 = vmatpush1.xpose.msra.mxu0 0.0
    %623 = vmatprep.subr.mxu0 0.0
    %624 = vmatpush1.xpose.msra.mxu0 0.0
    %625 = vmatprep.subr.mxu0 0.0
    %626 = vmatpush1.xpose.msra.mxu0 0.0
    %627 = vmatprep.subr.mxu0 0.0
    %628 = vmatpush1.xpose.msra.mxu0 0.0
    %629 = vmatprep.subr.mxu0 0.0
    %630 = vmatpush1.xpose.msra.mxu0 0.0
    %631 = vmatprep.mubr.f32.mxu0 0.0
    %632 = vmatmul.mubr.f32.gmra.mrb[0].mxu0 %v556
    %v633 = vpop.f32.mrb[0].mxu0
    %v634 = vadd.f32 %v566, %v633
    %v635 = vpop.f32.mrb[0].mxu0
    %636 = vdwg.mxu0
    %vm637 = vcmask 57344
    %638 = vst.msk [vmem:[#allocation11] sm:$0x1] %vm637, %v634
    // Predicated region
    $region54: #{critic_forward.1} parent=1 // pred_check
      _
    $region55: #{critic_forward.1} parent=1 // pred_check_branch
      %640 = sbr.rel (0) target = $region57
    $region56: #{critic_forward.1} parent=1 // pred_region
      %s642 = ssub.s32 16, 16
      %643 = vsyncadd [#allocation5], %s642
      %s645 = sshll.u32 [#allocation11], 4
      %s646 = int_to_ptr.vmem [resolvable:$true] %s645
      %648 = dma.vmem_to_hbm [thread:$0]  %s646, 16, %s9, [#allocation5]
    $region57: #{critic_forward.1} parent=1 // pred_fallthru
      _
    // Predicated region
    $region58: #{critic_forward.1} parent=1 // pred_check
      _
    $region59: #{critic_forward.1} parent=1 // pred_check_branch
      %650 = sbr.rel (0) target = $region61
    $region60: #{critic_forward.1} parent=1 // pred_region
      %651 = dma.done [#allocation5], 16
    $region61: #{critic_forward.1} parent=1 // pred_fallthru
      _
    %652 = vsyncpa [#allocation4], 1
    %653 = vsyncpa [#allocation7], 1
    %654 = vsyncpa [#allocation10], 1
    %655 = vsyncpa [#allocation5], 1

</llo_original>
